<compile_context>
chip_gen: v5e
topology: v5e:2x2
jax: 0.10.0
libtpu: 0.0.40
codegen_flags: <defaults>
</compile_context>

<pallas_src>
import jax
import jax.numpy as jnp
from jax.experimental import pallas as pl
from jax.experimental.pallas import tpu as pltpu

_LANES = 128
_DEFAULT_PHYS_VMEM = 64 * 1024 * 1024   # v7x per-core physical VMEM (smallest gen)


def _round_up(a, b):
    return -(-a // b) * b


def _make_tv_partial_kernel(w, hw):
    """Kernel over one (tbc, H*W) lane-dense block -> (1, 2, 128) partial sums."""

    def kernel(x_ref, out_ref):
        x = x_ref[...].astype(jnp.float32)           # (tbc, H*W), lane-dense rows

        # H-direction: elements W apart along the flat axis.
        if hw > w:                                   # i.e. H >= 2
            dh = x[:, w:] - x[:, :-w]
            h_sum = jnp.sum(dh * dh)
        else:
            h_sum = jnp.float32(0.0)

        # W-direction: adjacent flat elements; zero row-boundary crossings with
        # a (1, HW-1) mask built once per step and broadcast over sublanes.
        if w > 1:
            col = jax.lax.broadcasted_iota(jnp.int32, (1, hw - 1), 1)
            keep = ((col + 1) % w != 0).astype(jnp.float32)
            dw = (x[:, 1:] - x[:, :-1]) * keep
            w_sum = jnp.sum(dw * dw)
        else:
            w_sum = jnp.float32(0.0)

        # Full, unmasked lane-dense (1, 2, 128) store:
        # sublane 0 = h partial, sublane 1 = w partial (broadcast across lanes).
        sel = jax.lax.broadcasted_iota(jnp.int32, (1, 2, _LANES), 1)
        out_ref[...] = jnp.where(sel == 0, h_sum, w_sum)

    return kernel


def tv_loss(x, tv_loss_weight=1.0):
    """Exact equivalent of TVLoss.forward for NCHW input `x`."""
    B, C, H, W = x.shape
    bc = B * C
    flat = H * W
    itemsize = x.dtype.itemsize

    # ---- VMEM accounting on the *padded* layout -----------------------------
    lane_pad = _round_up(flat, _LANES)           # lane padding of one flat row
    sub = max(8, 32 // itemsize)                 # sublane packing: f32=8, bf16=16, i8=32
    in_row_bytes = lane_pad * itemsize           # one plane, input dtype, lane-padded
    f32_row_bytes = lane_pad * 4                 # one plane as f32
    # Double-buffered input block + ~5 f32-sized temporaries (astype, dh, dw,
    # squares / mask) for the block currently being computed.
    per_plane_bytes = 2 * in_row_bytes + 5 * f32_row_bytes

    phys_vmem = _DEFAULT_PHYS_VMEM
    try:
        phys_vmem = int(pltpu.get_tpu_info().vmem_capacity_bytes)
    except Exception:
        pass
    budget = int(phys_vmem * 0.60)               # resident-byte budget for sizing tbc

    # ---- planes per block ----------------------------------------------------
    tbc_by_bytes = max(1, budget // per_plane_bytes)
    tbc_by_grid = max(1, pl.cdiv(bc, 8))         # keep >= ~8 grid steps when possible
    tbc = max(1, min(tbc_by_bytes, tbc_by_grid, bc))
    tbc = max(sub, (tbc // sub) * sub)           # sublane-aligned block rows
    padded_bc = _round_up(bc, tbc)
    grid_len = padded_bc // tbc

    # TODO(synk): if even `sub` planes exceed the budget (huge H*W planes),
    # tile H with a 1-row halo via manual make_async_copy instead of relying on
    # a larger VMEM limit; such planes may still not fit v7x's 64 MiB VMEM.
    vmem_limit = min(max(32 * 1024 * 1024, int(per_plane_bytes * tbc * 1.25)),
                     int(phys_vmem * 0.80))

    # ---- data layout: flat, lane-dense rows; zero-pad the plane axis --------
    xr = x.reshape(bc, flat)
    if padded_bc != bc:
        xr = jnp.pad(xr, ((0, padded_bc - bc), (0, 0)))

    flops = 8 * bc * flat                        # diffs, squares, mask mul, adds
    bytes_accessed = padded_bc * flat * itemsize + grid_len * 2 * _LANES * 4

    partials = pl.pallas_call(
        _make_tv_partial_kernel(W, flat),
        out_shape=jax.ShapeDtypeStruct((grid_len, 2, _LANES), jnp.float32),
        grid=(grid_len,),
        in_specs=[pl.BlockSpec((tbc, flat), lambda i: (i, 0))],
        out_specs=pl.BlockSpec((1, 2, _LANES), lambda i: (i, 0, 0)),
        compiler_params=pltpu.CompilerParams(
            # Each grid step owns its own output slot -> safe to shard the
            # axis across TensorCores (2x on v7x megacore).
            dimension_semantics=("parallel",),
            vmem_limit_bytes=vmem_limit,
        ),
        cost_estimate=pl.CostEstimate(
            flops=flops, transcendentals=0, bytes_accessed=bytes_accessed),
    )(xr)

    h_tv = jnp.sum(partials[:, 0, 0])
    w_tv = jnp.sum(partials[:, 1, 0])
    count_h = C * (H - 1) * W    # tensor_size(x[:, :, 1:, :])
    count_w = C * H * (W - 1)    # tensor_size(x[:, :, :, 1:])
    return tv_loss_weight * 2.0 * (h_tv / count_h + w_tv / count_w) / B


if __name__ == "__main__":
    key = jax.random.PRNGKey(0)
    B, C, H, W = 2, 4, 16, 16
    x = jax.random.normal(key, (B, C, H, W), dtype=jnp.float32)

    out = tv_loss(x, tv_loss_weight=1.0)
    out = jax.block_until_ready(out)

    # Pure-JAX reference check (same math as the PyTorch module).
    h_tv_ref = jnp.sum((x[:, :, 1:, :] - x[:, :, :-1, :]) ** 2)
    w_tv_ref = jnp.sum((x[:, :, :, 1:] - x[:, :, :, :-1]) ** 2)
    ref = 1.0 * 2.0 * (h_tv_ref / (C * (H - 1) * W) + w_tv_ref / (C * H * (W - 1))) / B
    assert jnp.allclose(out, ref, rtol=1e-5, atol=1e-5), (out, ref)

    print("KERNEL_OK")
</pallas_src>

<mosaic_0001>
module attributes {stable_mosaic.version = 11 : i64} {
  func.func @kernel(%arg0: i32, %arg1: memref<8x256xf32, #tpu.memory_space<vmem>>, %arg2: memref<1x2x128xf32, #tpu.memory_space<vmem>>) attributes {dimension_semantics = [#tpu.dimension_semantics<parallel>], iteration_bounds = array<i64: 1>, scalar_prefetch = 0 : i64, scratch_operands = 0 : i64, tpu.core_type = #tpu.core_type<tc>, window_params = [{transform_indices = @transform_0, window_bounds = array<i64: 8, 256>}, {transform_indices = @transform_1, window_bounds = array<i64: 1, 2, 128>}]} {
    %c0 = arith.constant 0 : index
    %c0_0 = arith.constant 0 : index
    %0 = vector.load %arg1[%c0, %c0_0] : memref<8x256xf32, #tpu.memory_space<vmem>>, vector<8x256xf32>
    %1 = vector.extract_strided_slice %0 {offsets = [0, 16], sizes = [8, 240], strides = [1, 1]} : vector<8x256xf32> to vector<8x240xf32>
    %2 = vector.extract_strided_slice %0 {offsets = [0, 0], sizes = [8, 240], strides = [1, 1]} : vector<8x256xf32> to vector<8x240xf32>
    %3 = arith.subf %1, %2 : vector<8x240xf32>
    %4 = arith.mulf %3, %3 : vector<8x240xf32>
    %5 = vector.shape_cast %4 : vector<8x240xf32> to vector<1x8x240xf32>
    %cst = arith.constant dense<0.000000e+00> : vector<1xf32>
    %6 = vector.multi_reduction <add>, %5, %cst [1, 2] : vector<1x8x240xf32> to vector<1xf32>
    %7 = vector.shape_cast %6 : vector<1xf32> to vector<1x1x1xf32>
    %8 = vector.extract %7[0, 0, 0] : f32 from vector<1x1x1xf32>
    %9 = tpu.iota {dimensions = array<i32: 1>} : vector<1x255xi32>
    %c1_i32 = arith.constant 1 : i32
    %10 = vector.broadcast %c1_i32 : i32 to vector<1x255xi32>
    %11 = arith.addi %9, %10 : vector<1x255xi32>
    %c16_i32 = arith.constant 16 : i32
    %c0_i32 = arith.constant 0 : i32
    %12 = arith.cmpi eq, %c16_i32, %c0_i32 : i32
    %c1_i32_1 = arith.constant 1 : i32
    %13 = arith.select %12, %c1_i32_1, %c16_i32 : i32
    %14 = vector.broadcast %13 : i32 to vector<1x255xi32>
    %15 = arith.remsi %11, %14 : vector<1x255xi32>
    %c0_i32_2 = arith.constant 0 : i32
    %16 = vector.broadcast %c0_i32_2 : i32 to vector<1x255xi32>
    %17 = arith.cmpi ne, %15, %16 : vector<1x255xi32>
    %c0_i32_3 = arith.constant 0 : i32
    %18 = vector.broadcast %c0_i32_3 : i32 to vector<1x255xi32>
    %19 = arith.cmpi slt, %15, %18 : vector<1x255xi32>
    %c0_i32_4 = arith.constant 0 : i32
    %20 = arith.cmpi slt, %13, %c0_i32_4 : i32
    %21 = vector.broadcast %20 : i1 to vector<1x255xi1>
    %22 = vector.broadcast %21 : vector<1x255xi1> to vector<1x255xi1>
    %23 = arith.xori %19, %22 : vector<1x255xi1>
    %24 = arith.andi %23, %17 : vector<1x255xi1>
    %25 = vector.broadcast %13 : i32 to vector<1x255xi32>
    %26 = arith.addi %15, %25 : vector<1x255xi32>
    %27 = arith.select %24, %26, %15 : vector<1x255xi1>, vector<1x255xi32>
    %c0_i32_5 = arith.constant 0 : i32
    %28 = vector.broadcast %c0_i32_5 : i32 to vector<1x255xi32>
    %29 = arith.cmpi ne, %27, %28 : vector<1x255xi32>
    %30 = arith.extui %29 : vector<1x255xi1> to vector<1x255xi32>
    %31 = arith.sitofp %30 : vector<1x255xi32> to vector<1x255xf32>
    %32 = vector.extract_strided_slice %0 {offsets = [0, 1], sizes = [8, 255], strides = [1, 1]} : vector<8x256xf32> to vector<8x255xf32>
    %33 = vector.extract_strided_slice %0 {offsets = [0, 0], sizes = [8, 255], strides = [1, 1]} : vector<8x256xf32> to vector<8x255xf32>
    %34 = arith.subf %32, %33 : vector<8x255xf32>
    %35 = vector.broadcast %31 : vector<1x255xf32> to vector<8x255xf32>
    %36 = arith.mulf %34, %35 : vector<8x255xf32>
    %37 = arith.mulf %36, %36 : vector<8x255xf32>
    %38 = vector.shape_cast %37 : vector<8x255xf32> to vector<1x8x255xf32>
    %cst_6 = arith.constant dense<0.000000e+00> : vector<1xf32>
    %39 = vector.multi_reduction <add>, %38, %cst_6 [1, 2] : vector<1x8x255xf32> to vector<1xf32>
    %40 = vector.shape_cast %39 : vector<1xf32> to vector<1x1x1xf32>
    %41 = vector.extract %40[0, 0, 0] : f32 from vector<1x1x1xf32>
    %42 = tpu.iota {dimensions = array<i32: 1>} : vector<1x2x128xi32>
    %c0_i32_7 = arith.constant 0 : i32
    %43 = vector.broadcast %c0_i32_7 : i32 to vector<1x2x128xi32>
    %44 = arith.cmpi eq, %42, %43 : vector<1x2x128xi32>
    %45 = vector.broadcast %8 : f32 to vector<1x2x128xf32>
    %46 = vector.broadcast %41 : f32 to vector<1x2x128xf32>
    %47 = arith.select %44, %45, %46 : vector<1x2x128xi1>, vector<1x2x128xf32>
    %c0_8 = arith.constant 0 : index
    %c0_9 = arith.constant 0 : index
    %c0_10 = arith.constant 0 : index
    %48 = vector.load %arg2[%c0_8, %c0_9, %c0_10] : memref<1x2x128xf32, #tpu.memory_space<vmem>>, vector<1x2x128xf32>
    tpu.vector_store %arg2[%c0_8, %c0_9, %c0_10], %47 {strides = array<i32>} : memref<1x2x128xf32, #tpu.memory_space<vmem>>, vector<1x2x128xf32>,
    return
  }
  func.func @transform_0(%arg0: i32) -> (i32, i32) {
    %c0_i32 = arith.constant 0 : i32
    %c0_i32_0 = arith.constant 0 : i32
    return %arg0, %c0_i32 : i32, i32
  }
  func.func @transform_1(%arg0: i32) -> (i32, i32, i32) {
    %c0_i32 = arith.constant 0 : i32
    %c0_i32_0 = arith.constant 0 : i32
    %c0_i32_1 = arith.constant 0 : i32
    return %arg0, %c0_i32, %c0_i32_0 : i32, i32, i32
  }
}

</mosaic_0001>

<llo_original>
// kernel: tpu_custom_call.1
$region0: #{tpu_custom_call.1}
  #allocation0 [shape = 'u32[]', space=smem, size = 0x4, offset = 0x4, fixed_abs, tag = 'smem constant byte address 0x4 - core index']
  #allocation1 [shape = 'u32[72,128]{1,0:T(1,128)}', space=vmem, size = 0x9000, scoped, tag = 'internal scratch']
  %s0 = inlined_call_operand.hbm [shape: f32[8,256], index: 0, kind: input, shape index: {}]
  %s1 = inlined_call_operand.hbm [shape: f32[1,2,128], index: 1, kind: output, shape index: {}]
  %s2 = sld [smem:[#allocation0]]
  $region18: #{tpu_custom_call.1} parent=0
    _
  %s4 = ssub.s32 1, %s2
  %s5 = scalar_select 0, %s4, %s2
  $region1: #{tpu_custom_call.1} parent=0
    #allocation2 [shape = 'u8[8192]{0}', space=vmem, size = 0x2000, scoped, tag = 'input window, operand 0, single buffered']
    #allocation3 [shape = 's32[1]{0}', space=sflag, size = 0x4, scoped, tag = 'scoped memory for tpu_custom_call.1']
    #allocation4 [shape = 's32[1]{0}', space=sflag, size = 0x4, scoped, tag = 'scoped memory for tpu_custom_call.1']
    #allocation5 [shape = 'u8[1024]{0}', space=vmem, size = 0x400, scoped, tag = 'output window, operand 0, single buffered']
    %6 = vsyncpa [#allocation3], 0
    %7 = vsyncpa [#allocation4], 0
    // Predicated region
    $region2: #{tpu_custom_call.1} parent=1 // pred_check
      _
    $region3: #{tpu_custom_call.1} parent=1 // pred_check_branch
      %9 = sbr.rel (0) target = $region5
    $region4: #{tpu_custom_call.1} parent=1 // pred_region
      %11 = vsyncadd [#allocation3], 0
      %s13 = sshll.u32 %s0, 4
      %s14 = int_to_ptr.hbm [resolvable:$true] %s13
      %s15 = sshll.u32 [#allocation2], 4
      %s16 = int_to_ptr.vmem [resolvable:$true] %s15
      %18 = dma.hbm_to_vmem [thread:$0]  %s14, 256, %s16, [#allocation3]
    $region5: #{tpu_custom_call.1} parent=1 // pred_fallthru
      _
    // Predicated region
    $region6: #{tpu_custom_call.1} parent=1 // pred_check
      _
    $region7: #{tpu_custom_call.1} parent=1 // pred_check_branch
      %20 = sbr.rel (0) target = $region9
    $region8: #{tpu_custom_call.1} parent=1 // pred_region
      %22 = dma.done [#allocation3], 256
    $region9: #{tpu_custom_call.1} parent=1 // pred_fallthru
      _
    %v23 = vld [vmem:[#allocation2] sm:$0xff]
    %v24 = vld [vmem:[#allocation2 + $0x8] sm:$0xff]
    %27 = vrot.lane.b32.xlu0 %v23, 16
    %v28 = vpop.permute.xlu0 %27
    %29 = vrot.lane.b32.xlu0 %v24, 16
    %v30 = vpop.permute.xlu0 %29
    %vm31 = vcmask 130048
    %v32 = vsel %vm31, %v28, %v30
    %v35 = vsub.f32 %v23, %v28
    %v36 = vsub.f32 %v24, %v32
    %v37 = vmul.f32 %v35, %v35
    %v38 = vmul.f32 %v36, %v36
    %41 = vrot.lane.b32.xlu0 %v37, 112
    %v42 = vpop.permute.xlu0 %41
    %43 = vrot.lane.b32.xlu0 %v38, 112
    %v44 = vpop.permute.xlu0 %43
    %vm45 = vcmask 916480
    %v46 = vsel %vm45, %v42, %v44
    %v49 = vsel %vm45, %v44, 0.0
    %v50 = vadd.f32 %v46, %v49
    %51 = vadd.xlane.f32.xlu0 %v50
    %v52 = vpop.xlane.xlu0 %51
    %v53 = vrot.slane %v52, 4
    %v54 = vadd.f32 %v52, %v53
    %v55 = vrot.slane %v54, 2
    %v56 = vadd.f32 %v54, %v55
    %v57 = vrot.slane %v56, 1
    %v58 = vadd.f32 %v56, %v57
    %s59 = vtos %v58
    %v60 = vlaneseq
    %v61 = vand.u32 %v60, 127
    %v62 = vadd.s32 %v61, 128
    %v63 = vadd.s32 %v61, 1
    %v64 = vadd.s32 %v62, 1
    %vm65 = vcmp.lt.s32.totalorder %v63, 0
    %v66 = vsub.s32 0, %v63
    %v67 = vsel %vm65, %v66, %v63
    %v68 = vshrl.u32 %v67, 4
    %v69 = vand.u32 %v67, 15
    %v70 = vsub.s32 0, %v69
    %v71 = vsel %vm65, %v70, %v69
    %vm72 = vcmp.lt.s32.totalorder %v64, 0
    %v73 = vsub.s32 0, %v64
    %v74 = vsel %vm72, %v73, %v64
    %v75 = vshrl.u32 %v74, 4
    %v76 = vand.u32 %v74, 15
    %v77 = vsub.s32 0, %v76
    %v78 = vsel %vm72, %v77, %v76
    %vm79 = vcmp.ne.s32.totalorder %v71, 0
    %vm80 = vcmp.ne.s32.totalorder %v78, 0
    %vm81 = vcmp.lt.s32.totalorder %v71, 0
    %vm82 = vcmp.lt.s32.totalorder %v78, 0
    %vm83 = vmand %vm81, %vm79
    %vm84 = vmand %vm82, %vm80
    %v85 = vadd.s32 %v71, 16
    %v86 = vadd.s32 %v78, 16
    %v87 = vsel %vm83, %v85, %v71
    %v88 = vsel %vm84, %v86, %v78
    %vm89 = vcmp.ne.s32.totalorder %v87, 0
    %vm90 = vcmp.ne.s32.totalorder %v88, 0
    %v91 = vsel %vm89, 1, 0
    %v92 = vsel %vm90, 1, 0
    %v93 = vcvt.s32.f32 %v91
    %v94 = vcvt.s32.f32 %v92
    %95 = vrot.lane.b32.xlu0 %v23, 1
    %v96 = vpop.permute.xlu0 %95
    %97 = vrot.lane.b32.xlu0 %v24, 1
    %v98 = vpop.permute.xlu0 %97
    %vm99 = vcmask 7168
    %v100 = vsel %vm99, %v96, %v98
    %v103 = vsub.f32 %v23, %v96
    %v104 = vsub.f32 %v24, %v100
    %107 = vrot.lane.b32.xlu0 %v93, 1
    %v108 = vpop.permute.xlu0 %107
    %109 = vrot.lane.b32.xlu0 %v94, 1
    %v110 = vpop.permute.xlu0 %109
    %v111 = vsel %vm99, %v108, %v110
    %v114 = vmul.f32 %v103, %v108
    %v115 = vmul.f32 %v104, %v111
    %v116 = vmul.f32 %v114, %v114
    %v117 = vmul.f32 %v115, %v115
    %120 = vrot.lane.b32.xlu0 %v116, 127
    %v121 = vpop.permute.xlu0 %120
    %122 = vrot.lane.b32.xlu0 %v117, 127
    %v123 = vpop.permute.xlu0 %122
    %vm124 = vcmask 1039360
    %v125 = vsel %vm124, %v121, %v123
    %v128 = vsel %vm124, %v123, 0.0
    %v129 = vadd.f32 %v125, %v128
    %130 = vadd.xlane.f32.xlu0 %v129
    %v131 = vpop.xlane.xlu0 %130
    %v132 = vrot.slane %v131, 4
    %v133 = vadd.f32 %v131, %v132
    %v134 = vrot.slane %v133, 2
    %v135 = vadd.f32 %v133, %v134
    %v136 = vrot.slane %v135, 1
    %v137 = vadd.f32 %v135, %v136
    %s138 = vtos %v137
    %v139 = vlaneseq
    %v140 = vshrl.u32 %v139, 7
    %vm141 = vcmp.eq.s32.totalorder %v140, 0
    %v142 = vstv %s59
    %v143 = vstv %s138
    %v144 = vsel %vm141, %v142, %v143
    %145 = vst [vmem:[#allocation5] sm:$0x3] %v144
    // Predicated region
    $region10: #{tpu_custom_call.1} parent=1 // pred_check
      _
    $region11: #{tpu_custom_call.1} parent=1 // pred_check_branch
      %147 = sbr.rel (0) target = $region13
    $region12: #{tpu_custom_call.1} parent=1 // pred_region
      %149 = vsyncadd [#allocation4], 0
      %s151 = sshll.u32 [#allocation5], 4
      %s152 = int_to_ptr.vmem [resolvable:$true] %s151
      %s153 = sshll.u32 %s1, 4
      %s154 = int_to_ptr.hbm [resolvable:$true] %s153
      %156 = dma.vmem_to_hbm [thread:$0]  %s152, 32, %s154, [#allocation4]
    $region13: #{tpu_custom_call.1} parent=1 // pred_fallthru
      _
    // Predicated region
    $region14: #{tpu_custom_call.1} parent=1 // pred_check
      _
    $region15: #{tpu_custom_call.1} parent=1 // pred_check_branch
      %158 = sbr.rel (0) target = $region17
    $region16: #{tpu_custom_call.1} parent=1 // pred_region
      %160 = dma.done [#allocation4], 32
    $region17: #{tpu_custom_call.1} parent=1 // pred_fallthru
      _
    %161 = vsyncpa [#allocation3], 1
    %162 = vsyncpa [#allocation4], 1

</llo_original>
